<compile_context>
chip_gen: v6e
topology: v6e:2x2x1
jax: 0.10.0
libtpu: 0.0.40
codegen_flags: <defaults>
</compile_context>

<pallas_src>
import functools

import jax
import jax.numpy as jnp
from jax.experimental import pallas as pl
from jax.experimental.pallas import tpu as pltpu

LANES = 128
SUBLANES = 8
DEFAULT_BLOCK_ROWS = 1024  # (1024, 128) f32 = 512 KiB per stream buffer


def _round_up(x: int, m: int) -> int:
    return ((x + m - 1) // m) * m


def _bce_partial_kernel(z_ref, y_ref, o_ref, *, n, block_rows, blocks_per_slice):
    """Accumulate partial sums of stable BCE-with-logits into o_ref (8, 128).

    z_ref: (block_rows, 128) logits
    y_ref: (block_rows, 128) raw labels; target = (labels >= 0)
    o_ref: (8, 128) f32 partial sums for this parallel slice (resident across b)
    """
    p = pl.program_id(0)  # parallel slice (split across TensorCores on v7x)
    b = pl.program_id(1)  # reduction step within the slice

    @pl.when(b == 0)
    def _():
        o_ref[...] = jnp.zeros_like(o_ref)

    z = z_ref[...]
    t = (y_ref[...] >= 0.0).astype(jnp.float32)

    # Numerically-stable BCE-with-logits (same formulation PyTorch uses):
    #   max(z, 0) - z * t + log(1 + exp(-|z|))
    per = jnp.maximum(z, 0.0) - z * t + jnp.log1p(jnp.exp(-jnp.abs(z)))

    # In-kernel validity mask (no mask stream from HBM): global element index < n.
    base = (p * blocks_per_slice + b) * (block_rows * LANES)
    row = jax.lax.broadcasted_iota(jnp.int32, z.shape, 0)
    col = jax.lax.broadcasted_iota(jnp.int32, z.shape, 1)
    gidx = base + row * LANES + col
    per = jnp.where(gidx < n, per, 0.0)

    # Vector accumulate: fold sublane-groups with VPU adds, keep (8, 128) partials.
    o_ref[...] += per.reshape(block_rows // SUBLANES, SUBLANES, LANES).sum(axis=0)


def bce_with_logits_loss(logits: jax.Array, labels: jax.Array) -> jax.Array:
    """Mean BCE-with-logits over all N points.

    logits: (N,) float; labels: (N,) raw label values (target = labels >= 0).
    """
    n = logits.shape[0]
    assert labels.shape[0] == n

    rows = pl.cdiv(n, LANES)
    block_rows = min(DEFAULT_BLOCK_ROWS, _round_up(rows, SUBLANES))
    num_blocks = pl.cdiv(rows, block_rows)

    n_slices = 2 if num_blocks >= 2 else 1          # feeds both TCs on v7x
    blocks_per_slice = pl.cdiv(num_blocks, n_slices)
    rows_padded = n_slices * blocks_per_slice * block_rows
    pad = rows_padded * LANES - n

    # Only padding + free reshape in the wrapper; targets and the validity mask
    # are computed in-kernel, so only two f32 streams are read from HBM.
    z = jnp.pad(logits.astype(jnp.float32), (0, pad)).reshape(rows_padded, LANES)
    y = jnp.pad(labels.astype(jnp.float32), (0, pad), constant_values=-1.0)
    y = y.reshape(rows_padded, LANES)

    kernel = functools.partial(
        _bce_partial_kernel,
        n=n,
        block_rows=block_rows,
        blocks_per_slice=blocks_per_slice,
    )

    partials = pl.pallas_call(
        kernel,
        out_shape=jax.ShapeDtypeStruct((n_slices * SUBLANES, LANES), jnp.float32),
        grid_spec=pltpu.PrefetchScalarGridSpec(
            num_scalar_prefetch=0,
            grid=(n_slices, blocks_per_slice),
            in_specs=[
                pl.BlockSpec((block_rows, LANES),
                             lambda p, b: (p * blocks_per_slice + b, 0)),
                pl.BlockSpec((block_rows, LANES),
                             lambda p, b: (p * blocks_per_slice + b, 0)),
            ],
            out_specs=pl.BlockSpec((SUBLANES, LANES), lambda p, b: (p, 0)),
        ),
        compiler_params=pltpu.CompilerParams(
            dimension_semantics=("parallel", "arbitrary"),
        ),
    )(z, y)

    # Tiny final reduce + mean on a (n_slices*8, 128) array.
    return jnp.sum(partials) / jnp.float32(n)


def bce_loss_module(x_features: jax.Array, y_features: jax.Array) -> jax.Array:
    """Equivalent of BCELoss.forward: logits = x.F[:, 0], targets = (y.F >= 0)."""
    logits = x_features[:, 0]
    return bce_with_logits_loss(logits, y_features)


def _reference(x_features: jax.Array, y_features: jax.Array) -> jax.Array:
    z = x_features[:, 0].astype(jnp.float32)
    t = (y_features >= 0).astype(jnp.float32)
    per = jnp.maximum(z, 0.0) - z * t + jnp.log1p(jnp.exp(-jnp.abs(z)))
    return jnp.mean(per)


if __name__ == "__main__":
    key = jax.random.PRNGKey(0)

    # Small synthetic point clouds: x.F is (N, C) features (logits = column 0),
    # y.F holds instance labels in [-1, 7] (>= 0 means positive class).
    ok = True
    for N in (512, 777):  # 777 exercises the non-128-aligned tail mask
        C = 4
        k1, k2, key = jax.random.split(key, 3)
        x_F = jax.random.normal(k1, (N, C), dtype=jnp.float32)
        y_F = jax.random.randint(k2, (N,), -1, 8).astype(jnp.float32)

        loss = bce_loss_module(x_F, y_F)
        loss = jax.block_until_ready(loss)

        ref = _reference(x_F, y_F)
        assert jnp.allclose(loss, ref, rtol=1e-5, atol=1e-5), (N, loss, ref)

    print("KERNEL_OK")
</pallas_src>

<mosaic_0001>
module attributes {stable_mosaic.version = 11 : i64} {
  func.func @_bce_partial_kernel(%arg0: i32, %arg1: i32, %arg2: memref<8x128xf32, #tpu.memory_space<vmem>>, %arg3: memref<8x128xf32, #tpu.memory_space<vmem>>, %arg4: memref<8x128xf32, #tpu.memory_space<vmem>>) attributes {dimension_semantics = [#tpu.dimension_semantics<parallel>, #tpu.dimension_semantics<arbitrary>], iteration_bounds = array<i64: 1, 1>, scalar_prefetch = 0 : i64, scratch_operands = 0 : i64, tpu.core_type = #tpu.core_type<tc>, window_params = [{transform_indices = @transform_0, window_bounds = array<i64: 8, 128>}, {transform_indices = @transform_1, window_bounds = array<i64: 8, 128>}, {transform_indices = @transform_2, window_bounds = array<i64: 8, 128>}]} {
    %c0_i32 = arith.constant 0 : i32
    %0 = arith.cmpi eq, %arg1, %c0_i32 : i32
    %1 = arith.extui %0 : i1 to i32
    %c0_i32_0 = arith.constant 0 : i32
    %2 = arith.cmpi ne, %1, %c0_i32_0 : i32
    scf.if %2 {
      %cst_12 = arith.constant 0.000000e+00 : f32
      %38 = vector.broadcast %cst_12 : f32 to vector<8x128xf32>
      %c0_13 = arith.constant 0 : index
      %c0_14 = arith.constant 0 : index
      %39 = vector.load %arg4[%c0_13, %c0_14] : memref<8x128xf32, #tpu.memory_space<vmem>>, vector<8x128xf32>
      tpu.vector_store %arg4[%c0_13, %c0_14], %38 {strides = array<i32>} : memref<8x128xf32, #tpu.memory_space<vmem>>, vector<8x128xf32>,
    } else {
    }
    %c0 = arith.constant 0 : index
    %c0_1 = arith.constant 0 : index
    %3 = vector.load %arg2[%c0, %c0_1] : memref<8x128xf32, #tpu.memory_space<vmem>>, vector<8x128xf32>
    %c0_2 = arith.constant 0 : index
    %c0_3 = arith.constant 0 : index
    %4 = vector.load %arg3[%c0_2, %c0_3] : memref<8x128xf32, #tpu.memory_space<vmem>>, vector<8x128xf32>
    %cst = arith.constant 0.000000e+00 : f32
    %5 = vector.broadcast %cst : f32 to vector<8x128xf32>
    %6 = arith.cmpf oge, %4, %5 : vector<8x128xf32>
    %7 = arith.extui %6 : vector<8x128xi1> to vector<8x128xi32>
    %8 = arith.sitofp %7 : vector<8x128xi32> to vector<8x128xf32>
    %cst_4 = arith.constant 0.000000e+00 : f32
    %9 = vector.broadcast %cst_4 : f32 to vector<8x128xf32>
    %10 = arith.maximumf %3, %9 : vector<8x128xf32>
    %11 = arith.mulf %3, %8 : vector<8x128xf32>
    %12 = arith.subf %10, %11 : vector<8x128xf32>
    %13 = math.absf %3 : vector<8x128xf32>
    %cst_5 = arith.constant 0.000000e+00 : f32
    %14 = vector.broadcast %cst_5 : f32 to vector<8x128xf32>
    %15 = arith.subf %14, %13 : vector<8x128xf32>
    %16 = math.exp %15 : vector<8x128xf32>
    %17 = math.log1p %16 : vector<8x128xf32>
    %18 = arith.addf %12, %17 : vector<8x128xf32>
    %c1_i32 = arith.constant 1 : i32
    %19 = arith.muli %arg0, %c1_i32 : i32
    %20 = arith.addi %19, %arg1 : i32
    %c1024_i32 = arith.constant 1024 : i32
    %21 = arith.muli %20, %c1024_i32 : i32
    %22 = tpu.iota {dimensions = array<i32: 0>} : vector<8x128xi32>
    %23 = tpu.iota {dimensions = array<i32: 1>} : vector<8x128xi32>
    %c128_i32 = arith.constant 128 : i32
    %24 = vector.broadcast %c128_i32 : i32 to vector<8x128xi32>
    %25 = arith.muli %22, %24 : vector<8x128xi32>
    %26 = vector.broadcast %21 : i32 to vector<8x128xi32>
    %27 = arith.addi %26, %25 : vector<8x128xi32>
    %28 = arith.addi %27, %23 : vector<8x128xi32>
    %c512_i32 = arith.constant 512 : i32
    %29 = vector.broadcast %c512_i32 : i32 to vector<8x128xi32>
    %30 = arith.cmpi slt, %28, %29 : vector<8x128xi32>
    %cst_6 = arith.constant 0.000000e+00 : f32
    %31 = vector.broadcast %cst_6 : f32 to vector<8x128xf32>
    %32 = arith.select %30, %18, %31 : vector<8x128xi1>, vector<8x128xf32>
    %c0_7 = arith.constant 0 : index
    %c0_8 = arith.constant 0 : index
    %33 = vector.load %arg4[%c0_7, %c0_8] : memref<8x128xf32, #tpu.memory_space<vmem>>, vector<8x128xf32>
    %34 = vector.shape_cast %32 : vector<8x128xf32> to vector<1x8x128xf32>
    %cst_9 = arith.constant dense<0.000000e+00> : vector<8x128xf32>
    %35 = vector.multi_reduction <add>, %34, %cst_9 [0] : vector<1x8x128xf32> to vector<8x128xf32>
    %36 = arith.addf %33, %35 : vector<8x128xf32>
    %c0_10 = arith.constant 0 : index
    %c0_11 = arith.constant 0 : index
    %37 = vector.load %arg4[%c0_10, %c0_11] : memref<8x128xf32, #tpu.memory_space<vmem>>, vector<8x128xf32>
    tpu.vector_store %arg4[%c0_10, %c0_11], %36 {strides = array<i32>} : memref<8x128xf32, #tpu.memory_space<vmem>>, vector<8x128xf32>,
    return
  }
  func.func @transform_0(%arg0: i32, %arg1: i32) -> (i32, i32) {
    %c1_i32 = arith.constant 1 : i32
    %0 = arith.muli %arg0, %c1_i32 : i32
    %1 = arith.addi %0, %arg1 : i32
    %c0_i32 = arith.constant 0 : i32
    %c0_i32_0 = arith.constant 0 : i32
    return %1, %c0_i32 : i32, i32
  }
  func.func @transform_1(%arg0: i32, %arg1: i32) -> (i32, i32) {
    %c1_i32 = arith.constant 1 : i32
    %0 = arith.muli %arg0, %c1_i32 : i32
    %1 = arith.addi %0, %arg1 : i32
    %c0_i32 = arith.constant 0 : i32
    %c0_i32_0 = arith.constant 0 : i32
    return %1, %c0_i32 : i32, i32
  }
  func.func @transform_2(%arg0: i32, %arg1: i32) -> (i32, i32) {
    %c0_i32 = arith.constant 0 : i32
    %c0_i32_0 = arith.constant 0 : i32
    return %arg0, %c0_i32 : i32, i32
  }
}

</mosaic_0001>

<llo_original>
// kernel: tpu_custom_call.1
$region0: #{tpu_custom_call.1}
  #allocation0 [shape = 'u32[]', space=smem, size = 0x4, offset = 0x4, fixed_abs, tag = 'smem constant byte address 0x4 - core index']
  #allocation1 [shape = 'u32[144,128]{1,0:T(1,128)}', space=vmem, size = 0x12000, scoped, tag = 'internal scratch']
  %s0 = inlined_call_operand.hbm [shape: f32[8,128], index: 0, kind: input, shape index: {}]
  %s1 = inlined_call_operand.hbm [shape: f32[8,128], index: 1, kind: input, shape index: {}]
  %s2 = inlined_call_operand.hbm [shape: f32[8,128], index: 2, kind: output, shape index: {}]
  %s3 = sld [smem:[#allocation0]]
  $region30: #{tpu_custom_call.1} parent=0
    _
  %s5 = ssub.s32 1, %s3
  %s6 = scalar_select 0, %s5, %s3
  $region1: #{tpu_custom_call.1} parent=0
    #allocation2 [shape = 'u8[4096]{0}', space=vmem, size = 0x1000, scoped, tag = 'input window, operand 0, single buffered']
    #allocation3 [shape = 's32[1]{0}', space=sflag, size = 0x4, scoped, tag = 'scoped memory for tpu_custom_call.1']
    #allocation4 [shape = 's32[1]{0}', space=sflag, size = 0x4, scoped, tag = 'scoped memory for tpu_custom_call.1']
    #allocation5 [shape = 'u8[4096]{0}', space=vmem, size = 0x1000, scoped, tag = 'input window, operand 1, single buffered']
    #allocation6 [shape = 's32[1]{0}', space=sflag, size = 0x4, scoped, tag = 'scoped memory for tpu_custom_call.1']
    #allocation7 [shape = 'u8[4096]{0}', space=vmem, size = 0x1000, scoped, tag = 'output window, operand 0, single buffered']
    %7 = vsyncpa [#allocation3], 0
    %8 = vsyncpa [#allocation6], 0
    %9 = vsyncpa [#allocation4], 0
    // Predicated region
    $region2: #{tpu_custom_call.1} parent=1 // pred_check
      _
    $region3: #{tpu_custom_call.1} parent=1 // pred_check_branch
      %11 = sbr.rel (0) target = $region5
    $region4: #{tpu_custom_call.1} parent=1 // pred_region
      %s12 = sadd.s32 0, 0
      %s14 = ssub.s32 128, 128
      %15 = vsyncadd [#allocation3], %s14
      %s16 = smul.addr %s12, 128
      %s17 = scalar_lea.hbm %s0, %s16
      %s19 = sshll.u32 [#allocation2], 4
      %s20 = int_to_ptr.vmem [resolvable:$true] %s19
      %22 = dma.hbm_to_vmem [thread:$0]  %s17, 128, %s20, [#allocation3]
    $region5: #{tpu_custom_call.1} parent=1 // pred_fallthru
      _
    // Predicated region
    $region6: #{tpu_custom_call.1} parent=1 // pred_check
      _
    $region7: #{tpu_custom_call.1} parent=1 // pred_check_branch
      %24 = sbr.rel (0) target = $region9
    $region8: #{tpu_custom_call.1} parent=1 // pred_region
      %s25 = sadd.s32 0, 0
      %s27 = ssub.s32 128, 128
      %28 = vsyncadd [#allocation6], %s27
      %s29 = smul.addr %s25, 128
      %s30 = scalar_lea.hbm %s1, %s29
      %s32 = sshll.u32 [#allocation5], 4
      %s33 = int_to_ptr.vmem [resolvable:$true] %s32
      %35 = dma.hbm_to_vmem [thread:$0]  %s30, 128, %s33, [#allocation6]
    $region9: #{tpu_custom_call.1} parent=1 // pred_fallthru
      _
    // Predicated region
    $region10: #{tpu_custom_call.1} parent=1 // pred_check
      _
    $region11: #{tpu_custom_call.1} parent=1 // pred_check_branch
      %37 = sbr.rel (0) target = $region13
    $region12: #{tpu_custom_call.1} parent=1 // pred_region
      %38 = dma.done [#allocation3], 128
    $region13: #{tpu_custom_call.1} parent=1 // pred_fallthru
      _
    // Predicated region
    $region14: #{tpu_custom_call.1} parent=1 // pred_check
      _
    $region15: #{tpu_custom_call.1} parent=1 // pred_check_branch
      %40 = sbr.rel (0) target = $region17
    $region16: #{tpu_custom_call.1} parent=1 // pred_region
      %41 = dma.done [#allocation6], 128
    $region17: #{tpu_custom_call.1} parent=1 // pred_fallthru
      _
    %s42 = sadd.s32 0, 0
    %s43 = sadd.s32 0, 0
    %p44 = scmp.eq.s32.totalorder 0, 0
    // Predicated region
    $region18: #{tpu_custom_call.1} parent=1 // pred_check
      %p45 = pneg %p44
    $region19: #{tpu_custom_call.1} parent=1 // pred_check_branch
      %47 = sbr.rel (%p45) target = $region21
    $region20: #{tpu_custom_call.1} parent=1 // pred_region
      %48 = vst [vmem:[#allocation7] sm:$0xff] 0.0
    $region21: #{tpu_custom_call.1} parent=1 // pred_fallthru
      _
    %v49 = vld [vmem:[#allocation2] sm:$0xff]
    %v50 = vld [vmem:[#allocation5] sm:$0xff]
    %vm51 = vcmp.ge.f32.partialorder %v50, 0.0
    %v52 = vsel %vm51, 1, 0
    %v53 = vcvt.s32.f32 %v52
    %v54 = vmax.f32 %v49, 0.0
    %v55 = vmul.f32 %v49, %v53
    %v56 = vsub.f32 %v54, %v55
    %v57 = vand.u32 2147483647, %v49
    %v58 = vsub.f32 0.0, %v57
    %v59 = vmul.f32 %v58, 1.442695
    %v60 = vpow.pop %v59
    %v61 = vadd.f32 %v60, 1.0
    %v62 = vlog2.pop %v61
    %v63 = vmul.f32 %v62, 0.6931472
    %v64 = vmul.f32 -0.5, %v60
    %v65 = vadd.f32 %v64, 1.0
    %v66 = vmul.f32 %v65, %v60
    %v67 = vand.u32 2147483647, %v60
    %vm68 = vcmp.lt.f32.partialorder %v67, 0.0004427343
    %v69 = vsel %vm68, %v66, %v63
    %v70 = vadd.f32 %v56, %v69
    %s71 = sadd.s32 0, 0
    %s72 = smul.u32 %s71, 1024
    %v73 = vlaneseq
    %v74 = vshrl.u32 %v73, 7
    %v75 = vlaneseq
    %v76 = vand.u32 %v75, 127
    %v77 = vmul.u32 %v74, 128
    %v78 = vstv %s72
    %v79 = vadd.s32 %v78, %v77
    %v80 = vadd.s32 %v79, %v76
    %vm81 = vcmp.lt.s32.totalorder %v80, 512
    %v82 = vsel %vm81, %v70, 0.0
    %v83 = vld [vmem:[#allocation7] sm:$0xff]
    %v84 = vadd.f32 %v82, 0.0
    %v85 = vadd.f32 %v83, %v84
    %86 = vst [vmem:[#allocation7] sm:$0xff] %v85
    // Predicated region
    $region22: #{tpu_custom_call.1} parent=1 // pred_check
      _
    $region23: #{tpu_custom_call.1} parent=1 // pred_check_branch
      %88 = sbr.rel (0) target = $region25
    $region24: #{tpu_custom_call.1} parent=1 // pred_region
      %s90 = ssub.s32 128, 128
      %91 = vsyncadd [#allocation4], %s90
      %s93 = sshll.u32 [#allocation7], 4
      %s94 = int_to_ptr.vmem [resolvable:$true] %s93
      %96 = dma.vmem_to_hbm [thread:$0]  %s94, 128, %s2, [#allocation4]
    $region25: #{tpu_custom_call.1} parent=1 // pred_fallthru
      _
    // Predicated region
    $region26: #{tpu_custom_call.1} parent=1 // pred_check
      _
    $region27: #{tpu_custom_call.1} parent=1 // pred_check_branch
      %98 = sbr.rel (0) target = $region29
    $region28: #{tpu_custom_call.1} parent=1 // pred_region
      %99 = dma.done [#allocation4], 128
    $region29: #{tpu_custom_call.1} parent=1 // pred_fallthru
      _
    %100 = vsyncpa [#allocation3], 1
    %101 = vsyncpa [#allocation6], 1
    %102 = vsyncpa [#allocation4], 1

</llo_original>
